<compile_context>
chip_gen: v6e
topology: v6e:2x2x1
jax: 0.10.0
libtpu: 0.0.40
codegen_flags: <defaults>
</compile_context>

<pallas_src>
import jax
import jax.numpy as jnp
from jax.experimental import pallas as pl
from jax.experimental.pallas import tpu as pltpu


def _exp_kernel(log_tau_ref, tau_ref):
    """log_tau_ref / tau_ref: whole (1, N) f32 tiles resident in VMEM.

    Single EUP exp pass, dense store. No grid, no scratch.
    """
    tau_ref[...] = jnp.exp(log_tau_ref[...])


def _exp_pallas_call(log_tau):
    # Whole-array VMEM operands: no block_shape / index_map, single invocation.
    return pl.pallas_call(
        _exp_kernel,
        out_shape=jax.ShapeDtypeStruct(log_tau.shape, log_tau.dtype),
        in_specs=[pl.BlockSpec(memory_space=pltpu.MemorySpace.VMEM)],
        out_specs=pl.BlockSpec(memory_space=pltpu.MemorySpace.VMEM),
    )(log_tau)


@jax.custom_vjp
def exp_param(log_tau):
    return _exp_pallas_call(log_tau)


def _exp_fwd(log_tau):
    tau = _exp_pallas_call(log_tau)
    return tau, tau  # residual = tau


def _exp_bwd(tau, g):
    # d(exp(x))/dx = exp(x) = tau
    return (g * tau,)


exp_param.defvjp(_exp_fwd, _exp_bwd)


def init_learnable_tau(init_tau=0.05):
    """Parameter stored as a (1, 1) f32 buffer — matches nn.Parameter(log(init_tau))
    but already kernel-shaped, so the forward needs no reshape op."""
    return jnp.full((1, 1), jnp.log(jnp.float32(init_tau)), dtype=jnp.float32)


def learnable_tau_forward(log_tau_param):
    """LearnableTau.forward(): tau = exp(log_tau).

    Accepts a (1, 1) parameter (or a lane-dense (1, N) batch of scalar params)
    and returns the same shape — no extra host-visible ops around the kernel.
    Differentiable: grad(tau) w.r.t. log_tau is tau.
    """
    return exp_param(log_tau_param)


if __name__ == "__main__":
    init_tau = 0.05
    log_tau = init_learnable_tau(init_tau)

    # Forward at the module-default parameter value.
    tau = jax.block_until_ready(learnable_tau_forward(log_tau))
    ref = jnp.exp(log_tau)
    assert tau.shape == (1, 1), tau.shape
    assert jnp.allclose(tau, ref, atol=1e-6, rtol=1e-6)
    assert jnp.allclose(tau[0, 0], jnp.float32(init_tau), atol=1e-6, rtol=1e-6)

    # The parameter is learnable: gradient must flow (d tau / d log_tau = tau).
    g = jax.block_until_ready(
        jax.grad(lambda p: learnable_tau_forward(p).sum())(log_tau))
    assert jnp.allclose(g, ref, atol=1e-6, rtol=1e-6)

    # Deterministically-perturbed, batched (1, 128) lane-dense parameters:
    # one kernel call exps 128 taus in a single EUP pass.
    key = jax.random.PRNGKey(0)
    log_taus = (jnp.log(jnp.float32(init_tau))
                + 0.1 * jax.random.normal(key, (1, 128), jnp.float32))
    taus = jax.block_until_ready(learnable_tau_forward(log_taus))
    assert taus.shape == (1, 128), taus.shape
    assert jnp.allclose(taus, jnp.exp(log_taus), atol=1e-6, rtol=1e-6)

    print("KERNEL_OK")
</pallas_src>

<mosaic_0001>
module attributes {stable_mosaic.version = 11 : i64} {
  func.func @_exp_kernel(%arg0: memref<1x1xf32, #tpu.memory_space<vmem>>, %arg1: memref<1x1xf32, #tpu.memory_space<vmem>>) attributes {dimension_semantics = [], scalar_prefetch = 0 : i64, scratch_operands = 0 : i64, tpu.core_type = #tpu.core_type<tc>} {
    %c0 = arith.constant 0 : index
    %c0_0 = arith.constant 0 : index
    %0 = vector.load %arg0[%c0, %c0_0] : memref<1x1xf32, #tpu.memory_space<vmem>>, vector<1x1xf32>
    %1 = math.exp %0 : vector<1x1xf32>
    %c0_1 = arith.constant 0 : index
    %c0_2 = arith.constant 0 : index
    %2 = vector.load %arg1[%c0_1, %c0_2] : memref<1x1xf32, #tpu.memory_space<vmem>>, vector<1x1xf32>
    tpu.vector_store %arg1[%c0_1, %c0_2], %1 {strides = array<i32>} : memref<1x1xf32, #tpu.memory_space<vmem>>, vector<1x1xf32>,
    return
  }
}

</mosaic_0001>

<llo_original>
// kernel: tpu_custom_call.1
$region0: #{tpu_custom_call.1}
  #allocation0 [shape = 'u32[]', space=smem, size = 0x4, offset = 0x4, fixed_abs, tag = 'smem constant byte address 0x4 - core index']
  #allocation1 [shape = 'u32[144,128]{1,0:T(1,128)}', space=vmem, size = 0x12000, scoped, tag = 'internal scratch']
  #allocation2 [shape = 'f32[1,1]{1,0:T(1,128)S(1)}', space=vmem, size = 0x200, scoped, tag = 'scoped memory for tpu_custom_call.1']
  %s0 = inlined_call_operand.<no memory space> [shape: f32[1,1], index: 0, kind: input, shape index: {}]
  %s1 = inlined_call_operand.hbm [shape: f32[1,1], index: 1, kind: output, shape index: {}]
  %s2 = sld [smem:[#allocation0]]
  $region14: #{tpu_custom_call.1} parent=0
    _
  %s4 = ssub.s32 1, %s2
  %s5 = scalar_select 0, %s4, %s2
  %v6 = vstv %s0
  %7 = vst [vmem:[#allocation2] sm:$0x1] %v6
  $region1: #{tpu_custom_call.1} parent=0
    #allocation3 [shape = 'u8[512]{0}', space=vmem, size = 0x400, scoped, tag = 'output window, operand 0, single buffered']
    #allocation4 [shape = 's32[1]{0}', space=sflag, size = 0x4, scoped, tag = 'scoped memory for tpu_custom_call.1']
    %8 = vsyncpa [#allocation4], 0
    // Predicated region
    $region2: #{tpu_custom_call.1} parent=1 // pred_check
      _
    $region3: #{tpu_custom_call.1} parent=1 // pred_check_branch
      %10 = sbr.rel (0) target = $region5
    $region4: #{tpu_custom_call.1} parent=1 // pred_region
      _
    $region5: #{tpu_custom_call.1} parent=1 // pred_fallthru
      _
    %v11 = vld [vmem:[#allocation2] sm:$0x1]
    %v12 = vmul.f32 %v11, 1.442695
    %v13 = vpow.pop %v12
    %vm14 = vcmask 0
    %15 = vst.msk [vmem:[#allocation3] sm:$0x1] %vm14, %v13
    // Predicated region
    $region6: #{tpu_custom_call.1} parent=1 // pred_check
      _
    $region7: #{tpu_custom_call.1} parent=1 // pred_check_branch
      %17 = sbr.rel (0) target = $region9
    $region8: #{tpu_custom_call.1} parent=1 // pred_region
      %s19 = ssub.s32 16, 16
      %20 = vsyncadd [#allocation4], %s19
      %s22 = sshll.u32 [#allocation3], 4
      %s23 = int_to_ptr.vmem [resolvable:$true] %s22
      %25 = dma.vmem_to_hbm [thread:$0]  %s23, 16, %s1, [#allocation4]
    $region9: #{tpu_custom_call.1} parent=1 // pred_fallthru
      _
    // Predicated region
    $region10: #{tpu_custom_call.1} parent=1 // pred_check
      _
    $region11: #{tpu_custom_call.1} parent=1 // pred_check_branch
      %27 = sbr.rel (0) target = $region13
    $region12: #{tpu_custom_call.1} parent=1 // pred_region
      %28 = dma.done [#allocation4], 16
    $region13: #{tpu_custom_call.1} parent=1 // pred_fallthru
      _
    %29 = vsyncpa [#allocation4], 1

</llo_original>
